<compile_context>
chip_gen: v7x
topology: tpu7x:2x2x1
jax: 0.10.0
libtpu: 0.0.40
codegen_flags: <defaults>
</compile_context>

<pallas_src>
import math

import jax
import jax.numpy as jnp
from jax.experimental import pallas as pl
from jax.experimental.pallas import tpu as pltpu


def _round_up(x, m):
    return (x + m - 1) // m * m


# ---------------------------------------------------------------------------
# Kernel
# ---------------------------------------------------------------------------
def _twin_q_kernel(s_ref, a_ref,
                   w1_ref, b1_ref,
                   w2a_ref, w2b_ref, b2_ref,
                   w3_ref, b3_ref,
                   q_ref):
    H1 = w2a_ref.shape[0]
    H2 = w2a_ref.shape[1]

    # --- Layer 1 (both nets fused, output width 2*H1) -----------------------
    # Single merged matmul: concat([states, actions], -1) happens in-kernel on
    # VMEM-resident tiles, then one bf16 MXU push against the fused weight.
    x = jnp.concatenate([s_ref[...], a_ref[...]], axis=-1).astype(jnp.bfloat16)
    h1 = jnp.dot(x, w1_ref[...], preferred_element_type=jnp.float32) + b1_ref[...]
    # ReLU in f32, then store the handoff activation as bf16 (halves the
    # VMEM vst/vld bytes for the layer-1 -> layer-2 round trip).
    h1 = jnp.maximum(h1, 0.0).astype(jnp.bfloat16)

    # --- Layer 2, per net (256x256 matmuls; 128-aligned hidden split) -------
    h1a = h1[:, :H1]
    h1b = h1[:, H1:]
    h2a = jnp.maximum(
        jnp.dot(h1a, w2a_ref[...], preferred_element_type=jnp.float32)
        + b2_ref[:, :H2], 0.0)
    h2b = jnp.maximum(
        jnp.dot(h1b, w2b_ref[...], preferred_element_type=jnp.float32)
        + b2_ref[:, H2:], 0.0)

    # --- Layer 3 (width-1 heads): VPU multiply + XLU lane reduction ---------
    q1 = jnp.sum(h2a * w3_ref[:, :H2], axis=-1, keepdims=True)     # (BT, 1)
    q2 = jnp.sum(h2b * w3_ref[:, H2:], axis=-1, keepdims=True)     # (BT, 1)
    q12 = jnp.concatenate([q1, q2], axis=-1) + b3_ref[...]         # (BT, 2)

    # Lane-dense output: (2, BT) with batch along lanes.  The narrow XLU
    # transpose is tiny (2*BT f32) compared with the masked-store traffic it
    # removes from the old (BT, 2) layout.
    q_ref[...] = q12.T.astype(q_ref.dtype)


# ---------------------------------------------------------------------------
# Tiling choice
# ---------------------------------------------------------------------------
def _choose_tiling(batch):
    """Pick (tile_rows, n_steps) for the batch axis.

    * single tile (minimal padding, just sublane-rounded) up to BT_CAP rows,
    * otherwise an even number of 128-aligned tiles so the grid both amortizes
      the ~0.35us/step pipeline overhead and load-balances across v7x's 2 TCs.
    """
    BT_CAP = 2048                       # rows/step; activations stay well under VMEM
    b8 = _round_up(max(batch, 1), 8)
    if b8 <= BT_CAP:
        return b8, 1
    n_steps = max(2, pl.cdiv(b8, BT_CAP))
    if n_steps % 2:
        n_steps += 1                    # even step count -> balanced on 2-TC chips
    bt = _round_up(pl.cdiv(b8, n_steps), 128)   # 128-aligned lane-dense out block
    return bt, n_steps


# ---------------------------------------------------------------------------
# Wrapper
# ---------------------------------------------------------------------------
def twinned_q_forward(states, actions, kernel_params):
    """Forward pass of TwinnedStateActionFunction.

    states:  (B, Ds) float32
    actions: (B, Da) float32
    kernel_params: packed params (see pack_params).
    Returns (q1, q2), each (B, 1) float32.
    """
    kp = kernel_params
    B, Ds = states.shape
    Da = actions.shape[1]

    BT, n_steps = _choose_tiling(B)
    B_pad = BT * n_steps
    if B_pad != B:
        states = jnp.pad(states, ((0, B_pad - B), (0, 0)))
        actions = jnp.pad(actions, ((0, B_pad - B), (0, 0)))

    def resident(arr):
        # Whole array in VMEM, same block every grid step -> fetched once.
        return pl.BlockSpec(arr.shape, lambda i: (0, 0))

    q = pl.pallas_call(
        _twin_q_kernel,
        out_shape=jax.ShapeDtypeStruct((2, B_pad), jnp.float32),
        grid=(n_steps,),
        in_specs=[
            pl.BlockSpec((BT, Ds), lambda i: (i, 0)),   # states tile
            pl.BlockSpec((BT, Da), lambda i: (i, 0)),   # actions tile
            resident(kp["w1"]), resident(kp["b1"]),
            resident(kp["w2a"]), resident(kp["w2b"]), resident(kp["b2"]),
            resident(kp["w3"]), resident(kp["b3"]),
        ],
        # Lane-dense output block: q1/q2 rows, batch along lanes.
        out_specs=pl.BlockSpec((2, BT), lambda i: (0, i)),
        compiler_params=pltpu.CompilerParams(
            # batch axis is independent -> shards across TCs on multi-core chips.
            # (If profiling on v7x shows it not splitting, switch to
            #  pltpu.CORE_PARALLEL.)
            dimension_semantics=(pltpu.PARALLEL,),
            # Explicit limit so BT=2048 tiles also lower on v5e's 16 MiB
            # scoped default while staying under v7x's 64 MiB physical VMEM.
            vmem_limit_bytes=40 * 1024 * 1024),
    )(states, actions,
      kp["w1"], kp["b1"],
      kp["w2a"], kp["w2b"], kp["b2"],
      kp["w3"], kp["b3"])

    q = q[:, :B]                     # (2, B)
    return q[0][:, None], q[1][:, None]


# ---------------------------------------------------------------------------
# Parameters
# ---------------------------------------------------------------------------
def _linear_init(key, fan_in, fan_out):
    """Mimics torch.nn.Linear default init (uniform +-1/sqrt(fan_in))."""
    kw, kb = jax.random.split(key)
    bound = 1.0 / math.sqrt(fan_in)
    w = jax.random.uniform(kw, (fan_in, fan_out), jnp.float32, -bound, bound)
    b = jax.random.uniform(kb, (1, fan_out), jnp.float32, -bound, bound)
    return w, b


def init_params(key, state_dim, action_dim, hidden=(256, 256)):
    """Raw per-net f32 parameters, PyTorch-module semantics."""
    in_dim = state_dim + action_dim
    h1, h2 = hidden
    keys = jax.random.split(key, 6)

    def net(k0, k1, k2):
        w1, b1 = _linear_init(k0, in_dim, h1)
        w2, b2 = _linear_init(k1, h1, h2)
        w3, b3 = _linear_init(k2, h2, 1)
        return dict(w1=w1, b1=b1, w2=w2, b2=b2, w3=w3, b3=b3)

    return dict(net1=net(keys[0], keys[1], keys[2]),
                net2=net(keys[3], keys[4], keys[5]))


def pack_params(raw):
    """Pack raw params into the fused / bf16 layout the kernel expects."""
    n1, n2 = raw["net1"], raw["net2"]
    # Fused layer-1 weight (Ds+Da, 2*H1): both nets side by side.
    w1 = jnp.concatenate([n1["w1"], n2["w1"]], axis=1).astype(jnp.bfloat16)
    b1 = jnp.concatenate([n1["b1"], n2["b1"]], axis=1)                  # (1, 2*H1) f32
    w2a = n1["w2"].astype(jnp.bfloat16)                                 # (H1, H2)
    w2b = n2["w2"].astype(jnp.bfloat16)                                 # (H1, H2)
    b2 = jnp.concatenate([n1["b2"], n2["b2"]], axis=1)                  # (1, 2*H2) f32
    w3 = jnp.concatenate([n1["w3"].T, n2["w3"].T], axis=1)              # (1, 2*H2) f32
    b3 = jnp.concatenate([n1["b3"], n2["b3"]], axis=1)                  # (1, 2)    f32
    return dict(w1=w1, b1=b1, w2a=w2a, w2b=w2b, b2=b2, w3=w3, b3=b3)


# ---------------------------------------------------------------------------
# References
# ---------------------------------------------------------------------------
def _reference_forward_f32(states, actions, raw):
    """Exact PyTorch-module semantics in full f32."""
    xs = jnp.concatenate([states, actions], axis=-1)

    def mlp(p):
        h = jnp.maximum(xs @ p["w1"] + p["b1"], 0.0)
        h = jnp.maximum(h @ p["w2"] + p["b2"], 0.0)
        return h @ p["w3"] + p["b3"]

    return mlp(raw["net1"]), mlp(raw["net2"])


def _reference_forward_packed(states, actions, kp):
    """Pure-JAX replica of the kernel arithmetic (same bf16 casts)."""
    H1 = kp["w2a"].shape[0]
    H2 = kp["w2a"].shape[1]
    x = jnp.concatenate([states, actions], axis=-1).astype(jnp.bfloat16)
    h1 = jnp.dot(x, kp["w1"], preferred_element_type=jnp.float32) + kp["b1"]
    h1 = jnp.maximum(h1, 0.0).astype(jnp.bfloat16)
    h2a = jnp.maximum(jnp.dot(h1[:, :H1], kp["w2a"], preferred_element_type=jnp.float32)
                      + kp["b2"][:, :H2], 0.0)
    h2b = jnp.maximum(jnp.dot(h1[:, H1:], kp["w2b"], preferred_element_type=jnp.float32)
                      + kp["b2"][:, H2:], 0.0)
    q1 = jnp.sum(h2a * kp["w3"][:, :H2], axis=-1, keepdims=True) + kp["b3"][:, 0:1]
    q2 = jnp.sum(h2b * kp["w3"][:, H2:], axis=-1, keepdims=True) + kp["b3"][:, 1:2]
    return q1, q2


if __name__ == "__main__":
    key = jax.random.PRNGKey(0)
    k_params, k_s, k_a = jax.random.split(key, 3)

    batch = 4
    state_dim = 8
    action_dim = 4
    hidden = (256, 256)

    raw = init_params(k_params, state_dim, action_dim, hidden)
    kp = pack_params(raw)

    states = jax.random.normal(k_s, (batch, state_dim), jnp.float32)
    actions = jax.random.normal(k_a, (batch, action_dim), jnp.float32)

    q1, q2 = twinned_q_forward(states, actions, kp)
    q1 = jax.block_until_ready(q1)
    q2 = jax.block_until_ready(q2)
    assert q1.shape == (batch, 1) and q2.shape == (batch, 1)

    # Tight check: kernel vs. pure-JAX replica of the same bf16 arithmetic.
    p1, p2 = _reference_forward_packed(states, actions, kp)
    assert jnp.allclose(q1, p1, atol=2e-3, rtol=2e-3)
    assert jnp.allclose(q2, p2, atol=2e-3, rtol=2e-3)

    # Semantic check: close to the full-f32 PyTorch-equivalent forward
    # (bf16 weight/activation quantization accounts for the looser tolerance).
    r1, r2 = _reference_forward_f32(states, actions, raw)
    assert jnp.allclose(q1, r1, atol=5e-2, rtol=5e-2)
    assert jnp.allclose(q2, r2, atol=5e-2, rtol=5e-2)

    print("KERNEL_OK")
</pallas_src>

<mosaic_0001>
module attributes {stable_mosaic.version = 11 : i64} {
  func.func @_twin_q_kernel(%arg0: i32, %arg1: memref<8x8xf32, #tpu.memory_space<vmem>>, %arg2: memref<8x4xf32, #tpu.memory_space<vmem>>, %arg3: memref<12x512xbf16, #tpu.memory_space<vmem>>, %arg4: memref<1x512xf32, #tpu.memory_space<vmem>>, %arg5: memref<256x256xbf16, #tpu.memory_space<vmem>>, %arg6: memref<256x256xbf16, #tpu.memory_space<vmem>>, %arg7: memref<1x512xf32, #tpu.memory_space<vmem>>, %arg8: memref<1x512xf32, #tpu.memory_space<vmem>>, %arg9: memref<1x2xf32, #tpu.memory_space<vmem>>, %arg10: memref<2x8xf32, #tpu.memory_space<vmem>>) attributes {dimension_semantics = [#tpu.dimension_semantics<parallel>], iteration_bounds = array<i64: 1>, scalar_prefetch = 0 : i64, scratch_operands = 0 : i64, tpu.core_type = #tpu.core_type<tc>, window_params = [{transform_indices = @transform_0, window_bounds = array<i64: 8, 8>}, {transform_indices = @transform_1, window_bounds = array<i64: 8, 4>}, {pipeline_mode = #tpu.pipeline_mode<synchronous>, transform_indices = @transform_2, window_bounds = array<i64: 12, 512>}, {pipeline_mode = #tpu.pipeline_mode<synchronous>, transform_indices = @transform_3, window_bounds = array<i64: 1, 512>}, {pipeline_mode = #tpu.pipeline_mode<synchronous>, transform_indices = @transform_4, window_bounds = array<i64: 256, 256>}, {pipeline_mode = #tpu.pipeline_mode<synchronous>, transform_indices = @transform_5, window_bounds = array<i64: 256, 256>}, {pipeline_mode = #tpu.pipeline_mode<synchronous>, transform_indices = @transform_6, window_bounds = array<i64: 1, 512>}, {pipeline_mode = #tpu.pipeline_mode<synchronous>, transform_indices = @transform_7, window_bounds = array<i64: 1, 512>}, {pipeline_mode = #tpu.pipeline_mode<synchronous>, transform_indices = @transform_8, window_bounds = array<i64: 1, 2>}, {transform_indices = @transform_9, window_bounds = array<i64: 2, 8>}]} {
    %c0 = arith.constant 0 : index
    %c0_0 = arith.constant 0 : index
    %0 = vector.load %arg1[%c0, %c0_0] : memref<8x8xf32, #tpu.memory_space<vmem>>, vector<8x8xf32>
    %c0_1 = arith.constant 0 : index
    %c0_2 = arith.constant 0 : index
    %1 = vector.load %arg2[%c0_1, %c0_2] : memref<8x4xf32, #tpu.memory_space<vmem>>, vector<8x4xf32>
    %2 = tpu.concatenate %0, %1 in 1 : vector<8x8xf32>, vector<8x4xf32> -> vector<8x12xf32>
    %3 = arith.truncf %2 : vector<8x12xf32> to vector<8x12xbf16>
    %c0_3 = arith.constant 0 : index
    %c0_4 = arith.constant 0 : index
    %4 = vector.load %arg3[%c0_3, %c0_4] : memref<12x512xbf16, #tpu.memory_space<vmem>>, vector<12x512xbf16>
    %cst = arith.constant dense<0.000000e+00> : vector<8x512xf32>
    %5 = tpu.matmul %3, %4, %cst {dimension_numbers = #tpu.dot_dimension_numbers<[1], [0], [0], [1], [0, 0, 1, 1], [], []>} : vector<8x12xbf16>, vector<12x512xbf16>, vector<8x512xf32> -> vector<8x512xf32>
    %c0_5 = arith.constant 0 : index
    %c0_6 = arith.constant 0 : index
    %6 = vector.load %arg4[%c0_5, %c0_6] : memref<1x512xf32, #tpu.memory_space<vmem>>, vector<1x512xf32>
    %7 = vector.broadcast %6 : vector<1x512xf32> to vector<8x512xf32>
    %8 = arith.addf %5, %7 : vector<8x512xf32>
    %cst_7 = arith.constant 0.000000e+00 : f32
    %9 = vector.broadcast %cst_7 : f32 to vector<8x512xf32>
    %10 = arith.maximumf %8, %9 : vector<8x512xf32>
    %11 = arith.truncf %10 : vector<8x512xf32> to vector<8x512xbf16>
    %12 = vector.extract_strided_slice %11 {offsets = [0, 0], sizes = [8, 256], strides = [1, 1]} : vector<8x512xbf16> to vector<8x256xbf16>
    %13 = vector.extract_strided_slice %11 {offsets = [0, 256], sizes = [8, 256], strides = [1, 1]} : vector<8x512xbf16> to vector<8x256xbf16>
    %c0_8 = arith.constant 0 : index
    %c0_9 = arith.constant 0 : index
    %14 = vector.load %arg5[%c0_8, %c0_9] : memref<256x256xbf16, #tpu.memory_space<vmem>>, vector<256x256xbf16>
    %cst_10 = arith.constant dense<0.000000e+00> : vector<8x256xf32>
    %15 = tpu.matmul %12, %14, %cst_10 {dimension_numbers = #tpu.dot_dimension_numbers<[1], [0], [0], [1], [0, 0, 1, 1], [], []>} : vector<8x256xbf16>, vector<256x256xbf16>, vector<8x256xf32> -> vector<8x256xf32>
    %c0_11 = arith.constant 0 : index
    %c0_12 = arith.constant 0 : index
    %16 = vector.load %arg7[%c0_11, %c0_12] : memref<1x512xf32, #tpu.memory_space<vmem>>, vector<1x256xf32>
    %17 = vector.broadcast %16 : vector<1x256xf32> to vector<8x256xf32>
    %18 = arith.addf %15, %17 : vector<8x256xf32>
    %cst_13 = arith.constant 0.000000e+00 : f32
    %19 = vector.broadcast %cst_13 : f32 to vector<8x256xf32>
    %20 = arith.maximumf %18, %19 : vector<8x256xf32>
    %c0_14 = arith.constant 0 : index
    %c0_15 = arith.constant 0 : index
    %21 = vector.load %arg6[%c0_14, %c0_15] : memref<256x256xbf16, #tpu.memory_space<vmem>>, vector<256x256xbf16>
    %cst_16 = arith.constant dense<0.000000e+00> : vector<8x256xf32>
    %22 = tpu.matmul %13, %21, %cst_16 {dimension_numbers = #tpu.dot_dimension_numbers<[1], [0], [0], [1], [0, 0, 1, 1], [], []>} : vector<8x256xbf16>, vector<256x256xbf16>, vector<8x256xf32> -> vector<8x256xf32>
    %c0_17 = arith.constant 0 : index
    %c256 = arith.constant 256 : index
    %23 = vector.load %arg7[%c0_17, %c256] : memref<1x512xf32, #tpu.memory_space<vmem>>, vector<1x256xf32>
    %24 = vector.broadcast %23 : vector<1x256xf32> to vector<8x256xf32>
    %25 = arith.addf %22, %24 : vector<8x256xf32>
    %cst_18 = arith.constant 0.000000e+00 : f32
    %26 = vector.broadcast %cst_18 : f32 to vector<8x256xf32>
    %27 = arith.maximumf %25, %26 : vector<8x256xf32>
    %c0_19 = arith.constant 0 : index
    %c0_20 = arith.constant 0 : index
    %28 = vector.load %arg8[%c0_19, %c0_20] : memref<1x512xf32, #tpu.memory_space<vmem>>, vector<1x256xf32>
    %29 = vector.broadcast %28 : vector<1x256xf32> to vector<8x256xf32>
    %30 = arith.mulf %20, %29 : vector<8x256xf32>
    %cst_21 = arith.constant dense<0.000000e+00> : vector<8xf32>
    %31 = vector.multi_reduction <add>, %30, %cst_21 [1] : vector<8x256xf32> to vector<8xf32>
    %32 = vector.shape_cast %31 : vector<8xf32> to vector<8x1xf32>
    %c0_22 = arith.constant 0 : index
    %c256_23 = arith.constant 256 : index
    %33 = vector.load %arg8[%c0_22, %c256_23] : memref<1x512xf32, #tpu.memory_space<vmem>>, vector<1x256xf32>
    %34 = vector.broadcast %33 : vector<1x256xf32> to vector<8x256xf32>
    %35 = arith.mulf %27, %34 : vector<8x256xf32>
    %cst_24 = arith.constant dense<0.000000e+00> : vector<8xf32>
    %36 = vector.multi_reduction <add>, %35, %cst_24 [1] : vector<8x256xf32> to vector<8xf32>
    %37 = vector.shape_cast %36 : vector<8xf32> to vector<8x1xf32>
    %38 = tpu.concatenate %32, %37 in 1 : vector<8x1xf32>, vector<8x1xf32> -> vector<8x2xf32>
    %c0_25 = arith.constant 0 : index
    %c0_26 = arith.constant 0 : index
    %39 = vector.load %arg9[%c0_25, %c0_26] : memref<1x2xf32, #tpu.memory_space<vmem>>, vector<1x2xf32>
    %40 = vector.broadcast %39 : vector<1x2xf32> to vector<8x2xf32>
    %41 = arith.addf %38, %40 : vector<8x2xf32>
    %42 = tpu.transpose %41, [1, 0] : vector<8x2xf32> -> vector<2x8xf32>
    %c0_27 = arith.constant 0 : index
    %c0_28 = arith.constant 0 : index
    %43 = vector.load %arg10[%c0_27, %c0_28] : memref<2x8xf32, #tpu.memory_space<vmem>>, vector<2x8xf32>
    tpu.vector_store %arg10[%c0_27, %c0_28], %42 {strides = array<i32>} : memref<2x8xf32, #tpu.memory_space<vmem>>, vector<2x8xf32>,
    return
  }
  func.func @transform_0(%arg0: i32) -> (i32, i32) {
    %c0_i32 = arith.constant 0 : i32
    %c0_i32_0 = arith.constant 0 : i32
    return %arg0, %c0_i32 : i32, i32
  }
  func.func @transform_1(%arg0: i32) -> (i32, i32) {
    %c0_i32 = arith.constant 0 : i32
    %c0_i32_0 = arith.constant 0 : i32
    return %arg0, %c0_i32 : i32, i32
  }
  func.func @transform_2(%arg0: i32) -> (i32, i32) {
    %c0_i32 = arith.constant 0 : i32
    %c0_i32_0 = arith.constant 0 : i32
    %c0_i32_1 = arith.constant 0 : i32
    return %c0_i32, %c0_i32_0 : i32, i32
  }
  func.func @transform_3(%arg0: i32) -> (i32, i32) {
    %c0_i32 = arith.constant 0 : i32
    %c0_i32_0 = arith.constant 0 : i32
    %c0_i32_1 = arith.constant 0 : i32
    return %c0_i32, %c0_i32_0 : i32, i32
  }
  func.func @transform_4(%arg0: i32) -> (i32, i32) {
    %c0_i32 = arith.constant 0 : i32
    %c0_i32_0 = arith.constant 0 : i32
    %c0_i32_1 = arith.constant 0 : i32
    return %c0_i32, %c0_i32_0 : i32, i32
  }
  func.func @transform_5(%arg0: i32) -> (i32, i32) {
    %c0_i32 = arith.constant 0 : i32
    %c0_i32_0 = arith.constant 0 : i32
    %c0_i32_1 = arith.constant 0 : i32
    return %c0_i32, %c0_i32_0 : i32, i32
  }
  func.func @transform_6(%arg0: i32) -> (i32, i32) {
    %c0_i32 = arith.constant 0 : i32
    %c0_i32_0 = arith.constant 0 : i32
    %c0_i32_1 = arith.constant 0 : i32
    return %c0_i32, %c0_i32_0 : i32, i32
  }
  func.func @transform_7(%arg0: i32) -> (i32, i32) {
    %c0_i32 = arith.constant 0 : i32
    %c0_i32_0 = arith.constant 0 : i32
    %c0_i32_1 = arith.constant 0 : i32
    return %c0_i32, %c0_i32_0 : i32, i32
  }
  func.func @transform_8(%arg0: i32) -> (i32, i32) {
    %c0_i32 = arith.constant 0 : i32
    %c0_i32_0 = arith.constant 0 : i32
    %c0_i32_1 = arith.constant 0 : i32
    return %c0_i32, %c0_i32_0 : i32, i32
  }
  func.func @transform_9(%arg0: i32) -> (i32, i32) {
    %c0_i32 = arith.constant 0 : i32
    %c0_i32_0 = arith.constant 0 : i32
    return %c0_i32, %arg0 : i32, i32
  }
}

</mosaic_0001>

<llo_original>
// kernel: tpu_custom_call.1
$region0: #{tpu_custom_call.1}
  #allocation0 [shape = 'u32[]', space=smem, size = 0x4, offset = 0x4, fixed_abs, tag = 'smem constant byte address 0x4 - core index']
  #allocation1 [shape = 'u32[144,128]{1,0:T(1,128)}', space=vmem, size = 0x12000, scoped, tag = 'internal scratch']
  %s0 = inlined_call_operand.vmem [shape: f32[8,8], index: 0, kind: input, shape index: {}]
  %s1 = inlined_call_operand.vmem [shape: f32[8,4], index: 1, kind: input, shape index: {}]
  %s2 = inlined_call_operand.hbm [shape: bf16[12,512], index: 2, kind: input, shape index: {}]
  %s3 = inlined_call_operand.vmem [shape: f32[1,512], index: 3, kind: input, shape index: {}]
  %s4 = inlined_call_operand.hbm [shape: bf16[256,256], index: 4, kind: input, shape index: {}]
  %s5 = inlined_call_operand.hbm [shape: bf16[256,256], index: 5, kind: input, shape index: {}]
  %s6 = inlined_call_operand.vmem [shape: f32[1,512], index: 6, kind: input, shape index: {}]
  %s7 = inlined_call_operand.vmem [shape: f32[1,512], index: 7, kind: input, shape index: {}]
  %s8 = inlined_call_operand.vmem [shape: f32[1,2], index: 8, kind: input, shape index: {}]
  %s9 = inlined_call_operand.hbm [shape: f32[2,8], index: 9, kind: output, shape index: {}]
  %s10 = sld [smem:[#allocation0]]
  $region58: #{tpu_custom_call.1} parent=0
    _
  %s12 = ssub.s32 1, %s10
  %s13 = scalar_select 0, %s12, %s10
  $region1: #{tpu_custom_call.1} parent=0
    #allocation2 [shape = 'u8[16384]{0}', space=vmem, size = 0x4000, scoped, tag = 'input window, operand 2, single buffered']
    #allocation3 [shape = 's32[1]{0}', space=sflag, size = 0x4, scoped, tag = 'scoped memory for tpu_custom_call.1']
    #allocation4 [shape = 's32[1]{0}', space=sflag, size = 0x4, scoped, tag = 'scoped memory for tpu_custom_call.1']
    #allocation5 [shape = 'u8[131072]{0}', space=vmem, size = 0x20000, scoped, tag = 'input window, operand 4, single buffered']
    #allocation6 [shape = 's32[1]{0}', space=sflag, size = 0x4, scoped, tag = 'scoped memory for tpu_custom_call.1']
    #allocation7 [shape = 'u8[131072]{0}', space=vmem, size = 0x20000, scoped, tag = 'input window, operand 5, single buffered']
    #allocation8 [shape = 'u8[1024]{0}', space=vmem, size = 0x400, scoped, tag = 'output window, operand 0, single buffered']
    %14 = vsyncpa [#allocation3], 0
    %15 = vsyncpa [#allocation6], 0
    %16 = vsyncpa [#allocation4], 0
    // Predicated region
    $region2: #{tpu_custom_call.1} parent=1 // pred_check
      _
    $region3: #{tpu_custom_call.1} parent=1 // pred_check_branch
      %18 = sbr.rel (0) target = $region5
    $region4: #{tpu_custom_call.1} parent=1 // pred_region
      _
    $region5: #{tpu_custom_call.1} parent=1 // pred_fallthru
      _
    // Predicated region
    $region6: #{tpu_custom_call.1} parent=1 // pred_check
      _
    $region7: #{tpu_custom_call.1} parent=1 // pred_check_branch
      %20 = sbr.rel (0) target = $region9
    $region8: #{tpu_custom_call.1} parent=1 // pred_region
      _
    $region9: #{tpu_custom_call.1} parent=1 // pred_fallthru
      _
    // Predicated region
    $region10: #{tpu_custom_call.1} parent=1 // pred_check
      _
    $region11: #{tpu_custom_call.1} parent=1 // pred_check_branch
      %22 = sbr.rel (0) target = $region13
    $region12: #{tpu_custom_call.1} parent=1 // pred_region
      %s24 = ssub.s32 512, 512
      %25 = vsyncadd [#allocation3], %s24
      %s26 = sshll.u32 [#allocation2], 4
      %s27 = int_to_ptr.vmem [resolvable:$true] %s26
      %32 = dma.hbm_to_vmem [thread:$0]  %s2, 512, %s27, [#allocation3], 256, 256, 16
    $region13: #{tpu_custom_call.1} parent=1 // pred_fallthru
      _
    // Predicated region
    $region14: #{tpu_custom_call.1} parent=1 // pred_check
      _
    $region15: #{tpu_custom_call.1} parent=1 // pred_check_branch
      %34 = sbr.rel (0) target = $region17
    $region16: #{tpu_custom_call.1} parent=1 // pred_region
      _
    $region17: #{tpu_custom_call.1} parent=1 // pred_fallthru
      _
    // Predicated region
    $region18: #{tpu_custom_call.1} parent=1 // pred_check
      _
    $region19: #{tpu_custom_call.1} parent=1 // pred_check_branch
      %36 = sbr.rel (0) target = $region21
    $region20: #{tpu_custom_call.1} parent=1 // pred_region
      %s38 = ssub.s32 4096, 4096
      %39 = vsyncadd [#allocation6], %s38
      %s40 = sshll.u32 [#allocation5], 4
      %s41 = int_to_ptr.vmem [resolvable:$true] %s40
      %46 = dma.hbm_to_vmem [thread:$0]  %s4, 4096, %s41, [#allocation6], 128, 128, 8
    $region21: #{tpu_custom_call.1} parent=1 // pred_fallthru
      _
    // Predicated region
    $region22: #{tpu_custom_call.1} parent=1 // pred_check
      _
    $region23: #{tpu_custom_call.1} parent=1 // pred_check_branch
      %48 = sbr.rel (0) target = $region25
    $region24: #{tpu_custom_call.1} parent=1 // pred_region
      %s50 = ssub.s32 4096, 4096
      %51 = vsyncadd [#allocation6], %s50
      %s52 = sshll.u32 [#allocation7], 4
      %s53 = int_to_ptr.vmem [resolvable:$true] %s52
      %58 = dma.hbm_to_vmem [thread:$0]  %s5, 4096, %s53, [#allocation6], 128, 128, 8
    $region25: #{tpu_custom_call.1} parent=1 // pred_fallthru
      _
    // Predicated region
    $region26: #{tpu_custom_call.1} parent=1 // pred_check
      _
    $region27: #{tpu_custom_call.1} parent=1 // pred_check_branch
      %60 = sbr.rel (0) target = $region29
    $region28: #{tpu_custom_call.1} parent=1 // pred_region
      _
    $region29: #{tpu_custom_call.1} parent=1 // pred_fallthru
      _
    // Predicated region
    $region30: #{tpu_custom_call.1} parent=1 // pred_check
      _
    $region31: #{tpu_custom_call.1} parent=1 // pred_check_branch
      %62 = sbr.rel (0) target = $region33
    $region32: #{tpu_custom_call.1} parent=1 // pred_region
      _
    $region33: #{tpu_custom_call.1} parent=1 // pred_fallthru
      _
    // Predicated region
    $region34: #{tpu_custom_call.1} parent=1 // pred_check
      _
    $region35: #{tpu_custom_call.1} parent=1 // pred_check_branch
      %64 = sbr.rel (0) target = $region37
    $region36: #{tpu_custom_call.1} parent=1 // pred_region
      _
    $region37: #{tpu_custom_call.1} parent=1 // pred_fallthru
      _
    // Predicated region
    $region38: #{tpu_custom_call.1} parent=1 // pred_check
      _
    $region39: #{tpu_custom_call.1} parent=1 // pred_check_branch
      %66 = sbr.rel (0) target = $region41
    $region40: #{tpu_custom_call.1} parent=1 // pred_region
      %67 = dma.done [#allocation3], 512
    $region41: #{tpu_custom_call.1} parent=1 // pred_fallthru
      _
    // Predicated region
    $region42: #{tpu_custom_call.1} parent=1 // pred_check
      _
    $region43: #{tpu_custom_call.1} parent=1 // pred_check_branch
      %69 = sbr.rel (0) target = $region45
    $region44: #{tpu_custom_call.1} parent=1 // pred_region
      %70 = dma.done [#allocation6], 4096
    $region45: #{tpu_custom_call.1} parent=1 // pred_fallthru
      _
    // Predicated region
    $region46: #{tpu_custom_call.1} parent=1 // pred_check
      _
    $region47: #{tpu_custom_call.1} parent=1 // pred_check_branch
      %72 = sbr.rel (0) target = $region49
    $region48: #{tpu_custom_call.1} parent=1 // pred_region
      %73 = dma.done [#allocation6], 4096
    $region49: #{tpu_custom_call.1} parent=1 // pred_fallthru
      _
    %v75 = vld [vmem:[%s0] sm:$0xff]
    %v76 = vld [vmem:[%s1] sm:$0xff]
    %78 = vrot.lane.b32.xlu0 %v76, 8
    %v79 = vpop.permute.xlu0 %78
    %vm81 = vcmask 64512
    %v82 = vsel %vm81, %v75, %v79
    %v83 = vpack.c.bf16 %v82, %v82
    %v84 = vld [vmem:[#allocation2] sm:$0xff]
    %v85 = vld [vmem:[#allocation2 + $0x8] sm:$0xff]
    %v86 = vld [vmem:[#allocation2 + $0x10] sm:$0x33]
    %v87 = vld [vmem:[#allocation2 + $0x18] sm:$0x33]
    %v88 = vld [vmem:[%s3] sm:$0xf]
    %v90 = vlaneseq
    %v91 = vshrl.u32 %v90, 7
    %v92 = vsub.s32 0, %v91
    %v93 = vrot.slane %v88, %v92
    %v94 = vlaneseq
    %v95 = vshrl.u32 %v94, 7
    %v96 = vsub.s32 1, %v95
    %v97 = vrot.slane %v88, %v96
    %v98 = vlaneseq
    %v99 = vshrl.u32 %v98, 7
    %v100 = vsub.s32 2, %v99
    %v101 = vrot.slane %v88, %v100
    %v102 = vlaneseq
    %v103 = vshrl.u32 %v102, 7
    %v104 = vsub.s32 3, %v103
    %v105 = vrot.slane %v88, %v104
    %v114 = vunpack.c.l.b16 %v84
    %v115 = vunpack.c.h.b16 %v84
    %v116 = vunpack.c.l.b16 %v85
    %v117 = vunpack.c.h.b16 %v85
    %v118 = vunpack.c.l.b16 %v86
    %v119 = vunpack.c.h.b16 %v86
    %v120 = vunpack.c.l.b16 %v87
    %v121 = vunpack.c.h.b16 %v87
    %v122 = vpack.c.b16 %v118, %v114
    %v123 = vpack.c.b16 %v119, %v115
    %v124 = vpack.c.b16 %v120, %v116
    %v125 = vpack.c.b16 %v121, %v117
    %vm126 = vcmask 97280
    %v128 = vsel %vm126, %v83, 0
    %vm130 = vcmask 1045504
    %v132 = vsel %vm130, %v122, 0
    %v135 = vsel %vm130, %v123, 0
    %v138 = vsel %vm130, %v124, 0
    %v141 = vsel %vm130, %v125, 0
    %143 = vmatprep.subr.bf16.mxu0 %v135
    %144 = vmatpush1.bf16.msra.mxu0 %v132
    %145 = vmatprep.subr.bf16.mxu0 0
    %146 = vmatpush1.bf16.msra.mxu0 0
    %147 = vmatprep.subr.bf16.mxu0 0
    %148 = vmatpush1.bf16.msra.mxu0 0
    %149 = vmatprep.subr.bf16.mxu0 0
    %150 = vmatpush1.bf16.msra.mxu0 0
    %151 = vmatprep.subr.bf16.mxu0 0
    %152 = vmatpush1.bf16.msra.mxu0 0
    %153 = vmatprep.subr.bf16.mxu0 0
    %154 = vmatpush1.bf16.msra.mxu0 0
    %155 = vmatprep.subr.bf16.mxu0 0
    %156 = vmatpush1.bf16.msra.mxu0 0
    %157 = vmatprep.subr.bf16.mxu0 0
    %158 = vmatpush1.bf16.msra.mxu0 0
    %159 = vmatprep.subr.bf16.mxu0 0
    %160 = vmatpush1.bf16.msra.mxu0 0
    %161 = vmatprep.subr.bf16.mxu0 0
    %162 = vmatpush1.bf16.msra.mxu0 0
    %163 = vmatprep.subr.bf16.mxu0 0
    %164 = vmatpush1.bf16.msra.mxu0 0
    %165 = vmatprep.subr.bf16.mxu0 0
    %166 = vmatpush1.bf16.msra.mxu0 0
    %167 = vmatprep.subr.bf16.mxu0 0
    %168 = vmatpush1.bf16.msra.mxu0 0
    %169 = vmatprep.subr.bf16.mxu0 0
    %170 = vmatpush1.bf16.msra.mxu0 0
    %171 = vmatprep.subr.bf16.mxu0 0
    %172 = vmatpush1.bf16.msra.mxu0 0
    %173 = vmatprep.subr.bf16.mxu0 0
    %174 = vmatpush1.bf16.msra.mxu0 0
    %175 = vmatprep.mubr.bf16.mxu0 0
    %176 = vmatmul.mubr.bf16.gmra.mrb[0].mxu0 %v128
    %v177 = vpop.f32.mrb[0].mxu0
    %v178 = vadd.f32 %v93, %v177
    %v179 = vpop.f32.mrb[0].mxu0
    %v180 = vadd.f32 %v97, %v179
    %v181 = vpop.f32.mrb[0].mxu0
    %v182 = vpop.f32.mrb[0].mxu0
    %183 = vdwg.mxu0
    %184 = vmatprep.subr.bf16.mxu0 %v141
    %185 = vmatpush1.bf16.msra.mxu0 %v138
    %186 = vmatprep.subr.bf16.mxu0 0
    %187 = vmatpush1.bf16.msra.mxu0 0
    %188 = vmatprep.subr.bf16.mxu0 0
    %189 = vmatpush1.bf16.msra.mxu0 0
    %190 = vmatprep.subr.bf16.mxu0 0
    %191 = vmatpush1.bf16.msra.mxu0 0
    %192 = vmatprep.subr.bf16.mxu0 0
    %193 = vmatpush1.bf16.msra.mxu0 0
    %194 = vmatprep.subr.bf16.mxu0 0
    %195 = vmatpush1.bf16.msra.mxu0 0
    %196 = vmatprep.subr.bf16.mxu0 0
    %197 = vmatpush1.bf16.msra.mxu0 0
    %198 = vmatprep.subr.bf16.mxu0 0
    %199 = vmatpush1.bf16.msra.mxu0 0
    %200 = vmatprep.subr.bf16.mxu0 0
    %201 = vmatpush1.bf16.msra.mxu0 0
    %202 = vmatprep.subr.bf16.mxu0 0
    %203 = vmatpush1.bf16.msra.mxu0 0
    %204 = vmatprep.subr.bf16.mxu0 0
    %205 = vmatpush1.bf16.msra.mxu0 0
    %206 = vmatprep.subr.bf16.mxu0 0
    %207 = vmatpush1.bf16.msra.mxu0 0
    %208 = vmatprep.subr.bf16.mxu0 0
    %209 = vmatpush1.bf16.msra.mxu0 0
    %210 = vmatprep.subr.bf16.mxu0 0
    %211 = vmatpush1.bf16.msra.mxu0 0
    %212 = vmatprep.subr.bf16.mxu0 0
    %213 = vmatpush1.bf16.msra.mxu0 0
    %214 = vmatprep.subr.bf16.mxu0 0
    %215 = vmatpush1.bf16.msra.mxu0 0
    %216 = vmatprep.mubr.bf16.mxu0 0
    %217 = vmatmul.mubr.bf16.gmra.mrb[0].mxu0 %v128
    %v218 = vpop.f32.mrb[0].mxu0
    %v219 = vadd.f32 %v101, %v218
    %v220 = vpop.f32.mrb[0].mxu0
    %v221 = vadd.f32 %v105, %v220
    %v222 = vpop.f32.mrb[0].mxu0
    %v223 = vpop.f32.mrb[0].mxu0
    %224 = vdwg.mxu0
    %v225 = vmax.f32 %v178, 0.0
    %v226 = vmax.f32 %v180, 0.0
    %v227 = vmax.f32 %v219, 0.0
    %v228 = vmax.f32 %v221, 0.0
    %v229 = vpack.c.bf16 %v225, %v225
    %v230 = vpack.c.bf16 %v226, %v226
    %v231 = vpack.c.bf16 %v227, %v227
    %v232 = vpack.c.bf16 %v228, %v228
    %v233 = vld [vmem:[#allocation5] sm:$0xff]
    %v234 = vld [vmem:[#allocation5 + $0x8] sm:$0xff]
    %v235 = vld [vmem:[#allocation5 + $0x10] sm:$0xff]
    %v236 = vld [vmem:[#allocation5 + $0x18] sm:$0xff]
    %v237 = vld [vmem:[#allocation5 + $0x20] sm:$0xff]
    %v238 = vld [vmem:[#allocation5 + $0x28] sm:$0xff]
    %v239 = vld [vmem:[#allocation5 + $0x30] sm:$0xff]
    %v240 = vld [vmem:[#allocation5 + $0x38] sm:$0xff]
    %v241 = vld [vmem:[#allocation5 + $0x40] sm:$0xff]
    %v242 = vld [vmem:[#allocation5 + $0x48] sm:$0xff]
    %v243 = vld [vmem:[#allocation5 + $0x50] sm:$0xff]
    %v244 = vld [vmem:[#allocation5 + $0x58] sm:$0xff]
    %v245 = vld [vmem:[#allocation5 + $0x60] sm:$0xff]
    %v246 = vld [vmem:[#allocation5 + $0x68] sm:$0xff]
    %v247 = vld [vmem:[#allocation5 + $0x70] sm:$0xff]
    %v248 = vld [vmem:[#allocation5 + $0x78] sm:$0xff]
    %v249 = vld [vmem:[#allocation5 + $0x80] sm:$0xff]
    %v250 = vld [vmem:[#allocation5 + $0x88] sm:$0xff]
    %v251 = vld [vmem:[#allocation5 + $0x90] sm:$0xff]
    %v252 = vld [vmem:[#allocation5 + $0x98] sm:$0xff]
    %v253 = vld [vmem:[#allocation5 + $0xa0] sm:$0xff]
    %v254 = vld [vmem:[#allocation5 + $0xa8] sm:$0xff]
    %v255 = vld [vmem:[#allocation5 + $0xb0] sm:$0xff]
    %v256 = vld [vmem:[#allocation5 + $0xb8] sm:$0xff]
    %v257 = vld [vmem:[#allocation5 + $0xc0] sm:$0xff]
    %v258 = vld [vmem:[#allocation5 + $0xc8] sm:$0xff]
    %v259 = vld [vmem:[#allocation5 + $0xd0] sm:$0xff]
    %v260 = vld [vmem:[#allocation5 + $0xd8] sm:$0xff]
    %v261 = vld [vmem:[#allocation5 + $0xe0] sm:$0xff]
    %v262 = vld [vmem:[#allocation5 + $0xe8] sm:$0xff]
    %v263 = vld [vmem:[#allocation5 + $0xf0] sm:$0xff]
    %v264 = vld [vmem:[#allocation5 + $0xf8] sm:$0xff]
    %v265 = vld [vmem:[%s6] sm:$0x3]
    %v267 = vlaneseq
    %v268 = vshrl.u32 %v267, 7
    %v269 = vsub.s32 0, %v268
    %v270 = vrot.slane %v265, %v269
    %v271 = vlaneseq
    %v272 = vshrl.u32 %v271, 7
    %v273 = vsub.s32 1, %v272
    %v274 = vrot.slane %v265, %v273
    %v309 = vunpack.c.l.b16 %v233
    %v310 = vunpack.c.h.b16 %v233
    %v311 = vunpack.c.l.b16 %v234
    %v312 = vunpack.c.h.b16 %v234
    %v313 = vunpack.c.l.b16 %v235
    %v314 = vunpack.c.h.b16 %v235
    %v315 = vunpack.c.l.b16 %v236
    %v316 = vunpack.c.h.b16 %v236
    %v317 = vunpack.c.l.b16 %v237
    %v318 = vunpack.c.h.b16 %v237
    %v319 = vunpack.c.l.b16 %v238
    %v320 = vunpack.c.h.b16 %v238
    %v321 = vunpack.c.l.b16 %v239
    %v322 = vunpack.c.h.b16 %v239
    %v323 = vunpack.c.l.b16 %v240
    %v324 = vunpack.c.h.b16 %v240
    %v325 = vunpack.c.l.b16 %v241
    %v326 = vunpack.c.h.b16 %v241
    %v327 = vunpack.c.l.b16 %v242
    %v328 = vunpack.c.h.b16 %v242
    %v329 = vunpack.c.l.b16 %v243
    %v330 = vunpack.c.h.b16 %v243
    %v331 = vunpack.c.l.b16 %v244
    %v332 = vunpack.c.h.b16 %v244
    %v333 = vunpack.c.l.b16 %v245
    %v334 = vunpack.c.h.b16 %v245
    %v335 = vunpack.c.l.b16 %v246
    %v336 = vunpack.c.h.b16 %v246
    %v337 = vunpack.c.l.b16 %v247
    %v338 = vunpack.c.h.b16 %v247
    %v339 = vunpack.c.l.b16 %v248
    %v340 = vunpack.c.h.b16 %v248
    %v341 = vunpack.c.l.b16 %v249
    %v342 = vunpack.c.h.b16 %v249
    %v343 = vunpack.c.l.b16 %v250
    %v344 = vunpack.c.h.b16 %v250
    %v345 = vunpack.c.l.b16 %v251
    %v346 = vunpack.c.h.b16 %v251
    %v347 = vunpack.c.l.b16 %v252
    %v348 = vunpack.c.h.b16 %v252
    %v349 = vunpack.c.l.b16 %v253
    %v350 = vunpack.c.h.b16 %v253
    %v351 = vunpack.c.l.b16 %v254
    %v352 = vunpack.c.h.b16 %v254
    %v353 = vunpack.c.l.b16 %v255
    %v354 = vunpack.c.h.b16 %v255
    %v355 = vunpack.c.l.b16 %v256
    %v356 = vunpack.c.h.b16 %v256
    %v357 = vunpack.c.l.b16 %v257
    %v358 = vunpack.c.h.b16 %v257
    %v359 = vunpack.c.l.b16 %v258
    %v360 = vunpack.c.h.b16 %v258
    %v361 = vunpack.c.l.b16 %v259
    %v362 = vunpack.c.h.b16 %v259
    %v363 = vunpack.c.l.b16 %v260
    %v364 = vunpack.c.h.b16 %v260
    %v365 = vunpack.c.l.b16 %v261
    %v366 = vunpack.c.h.b16 %v261
    %v367 = vunpack.c.l.b16 %v262
    %v368 = vunpack.c.h.b16 %v262
    %v369 = vunpack.c.l.b16 %v263
    %v370 = vunpack.c.h.b16 %v263
    %v371 = vunpack.c.l.b16 %v264
    %v372 = vunpack.c.h.b16 %v264
    %v373 = vpack.c.b16 %v311, %v309
    %v374 = vpack.c.b16 %v312, %v310
    %v375 = vpack.c.b16 %v315, %v313
    %v376 = vpack.c.b16 %v316, %v314
    %v377 = vpack.c.b16 %v319, %v317
    %v378 = vpack.c.b16 %v320, %v318
    %v379 = vpack.c.b16 %v323, %v321
    %v380 = vpack.c.b16 %v324, %v322
    %v381 = vpack.c.b16 %v327, %v325
    %v382 = vpack.c.b16 %v328, %v326
    %v383 = vpack.c.b16 %v331, %v329
    %v384 = vpack.c.b16 %v332, %v330
    %v385 = vpack.c.b16 %v335, %v333
    %v386 = vpack.c.b16 %v336, %v334
    %v387 = vpack.c.b16 %v339, %v337
    %v388 = vpack.c.b16 %v340, %v338
    %v389 = vpack.c.b16 %v343, %v341
    %v390 = vpack.c.b16 %v344, %v342
    %v391 = vpack.c.b16 %v347, %v345
    %v392 = vpack.c.b16 %v348, %v346
    %v393 = vpack.c.b16 %v351, %v349
    %v394 = vpack.c.b16 %v352, %v350
    %v395 = vpack.c.b16 %v355, %v353
    %v396 = vpack.c.b16 %v356, %v354
    %v397 = vpack.c.b16 %v359, %v357
    %v398 = vpack.c.b16 %v360, %v358
    %v399 = vpack.c.b16 %v363, %v361
    %v400 = vpack.c.b16 %v364, %v362
    %v401 = vpack.c.b16 %v367, %v365
    %v402 = vpack.c.b16 %v368, %v366
    %v403 = vpack.c.b16 %v371, %v369
    %v404 = vpack.c.b16 %v372, %v370
    %437 = vmatprep.subr.bf16.mxu0 %v374
    %438 = vmatpush1.bf16.msra.mxu0 %v373
    %439 = vmatprep.subr.bf16.mxu0 %v376
    %440 = vmatpush1.bf16.msra.mxu0 %v375
    %441 = vmatprep.subr.bf16.mxu0 %v378
    %442 = vmatpush1.bf16.msra.mxu0 %v377
    %443 = vmatprep.subr.bf16.mxu0 %v380
    %444 = vmatpush1.bf16.msra.mxu0 %v379
    %445 = vmatprep.subr.bf16.mxu0 %v382
    %446 = vmatpush1.bf16.msra.mxu0 %v381
    %447 = vmatprep.subr.bf16.mxu0 %v384
    %448 = vmatpush1.bf16.msra.mxu0 %v383
    %449 = vmatprep.subr.bf16.mxu0 %v386
    %450 = vmatpush1.bf16.msra.mxu0 %v385
    %451 = vmatprep.subr.bf16.mxu0 %v388
    %452 = vmatpush1.bf16.msra.mxu0 %v387
    %453 = vmatprep.subr.bf16.mxu0 %v390
    %454 = vmatpush1.bf16.msra.mxu0 %v389
    %455 = vmatprep.subr.bf16.mxu0 %v392
    %456 = vmatpush1.bf16.msra.mxu0 %v391
    %457 = vmatprep.subr.bf16.mxu0 %v394
    %458 = vmatpush1.bf16.msra.mxu0 %v393
    %459 = vmatprep.subr.bf16.mxu0 %v396
    %460 = vmatpush1.bf16.msra.mxu0 %v395
    %461 = vmatprep.subr.bf16.mxu0 %v398
    %462 = vmatpush1.bf16.msra.mxu0 %v397
    %463 = vmatprep.subr.bf16.mxu0 %v400
    %464 = vmatpush1.bf16.msra.mxu0 %v399
    %465 = vmatprep.subr.bf16.mxu0 %v402
    %466 = vmatpush1.bf16.msra.mxu0 %v401
    %467 = vmatprep.subr.bf16.mxu0 %v404
    %468 = vmatpush1.bf16.msra.mxu0 %v403
    %469 = vmatprep.mubr.bf16.mxu0 %v230
    %470 = vmatmul.mubr.bf16.gmra.mrb[0].mxu0 %v229
    %v471 = vpop.f32.mrb[0].mxu0
    %v472 = vadd.f32 %v270, %v471
    %v473 = vpop.f32.mrb[0].mxu0
    %v474 = vadd.f32 %v274, %v473
    %v475 = vpop.f32.mrb[0].mxu0
    %v476 = vpop.f32.mrb[0].mxu0
    %477 = vdwg.mxu0
    %v478 = vmax.f32 %v472, 0.0
    %v479 = vmax.f32 %v474, 0.0
    %v480 = vld [vmem:[#allocation7] sm:$0xff]
    %v481 = vld [vmem:[#allocation7 + $0x8] sm:$0xff]
    %v482 = vld [vmem:[#allocation7 + $0x10] sm:$0xff]
    %v483 = vld [vmem:[#allocation7 + $0x18] sm:$0xff]
    %v484 = vld [vmem:[#allocation7 + $0x20] sm:$0xff]
    %v485 = vld [vmem:[#allocation7 + $0x28] sm:$0xff]
    %v486 = vld [vmem:[#allocation7 + $0x30] sm:$0xff]
    %v487 = vld [vmem:[#allocation7 + $0x38] sm:$0xff]
    %v488 = vld [vmem:[#allocation7 + $0x40] sm:$0xff]
    %v489 = vld [vmem:[#allocation7 + $0x48] sm:$0xff]
    %v490 = vld [vmem:[#allocation7 + $0x50] sm:$0xff]
    %v491 = vld [vmem:[#allocation7 + $0x58] sm:$0xff]
    %v492 = vld [vmem:[#allocation7 + $0x60] sm:$0xff]
    %v493 = vld [vmem:[#allocation7 + $0x68] sm:$0xff]
    %v494 = vld [vmem:[#allocation7 + $0x70] sm:$0xff]
    %v495 = vld [vmem:[#allocation7 + $0x78] sm:$0xff]
    %v496 = vld [vmem:[#allocation7 + $0x80] sm:$0xff]
    %v497 = vld [vmem:[#allocation7 + $0x88] sm:$0xff]
    %v498 = vld [vmem:[#allocation7 + $0x90] sm:$0xff]
    %v499 = vld [vmem:[#allocation7 + $0x98] sm:$0xff]
    %v500 = vld [vmem:[#allocation7 + $0xa0] sm:$0xff]
    %v501 = vld [vmem:[#allocation7 + $0xa8] sm:$0xff]
    %v502 = vld [vmem:[#allocation7 + $0xb0] sm:$0xff]
    %v503 = vld [vmem:[#allocation7 + $0xb8] sm:$0xff]
    %v504 = vld [vmem:[#allocation7 + $0xc0] sm:$0xff]
    %v505 = vld [vmem:[#allocation7 + $0xc8] sm:$0xff]
    %v506 = vld [vmem:[#allocation7 + $0xd0] sm:$0xff]
    %v507 = vld [vmem:[#allocation7 + $0xd8] sm:$0xff]
    %v508 = vld [vmem:[#allocation7 + $0xe0] sm:$0xff]
    %v509 = vld [vmem:[#allocation7 + $0xe8] sm:$0xff]
    %v510 = vld [vmem:[#allocation7 + $0xf0] sm:$0xff]
    %v511 = vld [vmem:[#allocation7 + $0xf8] sm:$0xff]
    %v512 = vld [vmem:[%s6 + $0x2] sm:$0x3]
    %v514 = vlaneseq
    %v515 = vshrl.u32 %v514, 7
    %v516 = vsub.s32 0, %v515
    %v517 = vrot.slane %v512, %v516
    %v518 = vlaneseq
    %v519 = vshrl.u32 %v518, 7
    %v520 = vsub.s32 1, %v519
    %v521 = vrot.slane %v512, %v520
    %v556 = vunpack.c.l.b16 %v480
    %v557 = vunpack.c.h.b16 %v480
    %v558 = vunpack.c.l.b16 %v481
    %v559 = vunpack.c.h.b16 %v481
    %v560 = vunpack.c.l.b16 %v482
    %v561 = vunpack.c.h.b16 %v482
    %v562 = vunpack.c.l.b16 %v483
    %v563 = vunpack.c.h.b16 %v483
    %v564 = vunpack.c.l.b16 %v484
    %v565 = vunpack.c.h.b16 %v484
    %v566 = vunpack.c.l.b16 %v485
    %v567 = vunpack.c.h.b16 %v485
    %v568 = vunpack.c.l.b16 %v486
    %v569 = vunpack.c.h.b16 %v486
    %v570 = vunpack.c.l.b16 %v487
    %v571 = vunpack.c.h.b16 %v487
    %v572 = vunpack.c.l.b16 %v488
    %v573 = vunpack.c.h.b16 %v488
    %v574 = vunpack.c.l.b16 %v489
    %v575 = vunpack.c.h.b16 %v489
    %v576 = vunpack.c.l.b16 %v490
    %v577 = vunpack.c.h.b16 %v490
    %v578 = vunpack.c.l.b16 %v491
    %v579 = vunpack.c.h.b16 %v491
    %v580 = vunpack.c.l.b16 %v492
    %v581 = vunpack.c.h.b16 %v492
    %v582 = vunpack.c.l.b16 %v493
    %v583 = vunpack.c.h.b16 %v493
    %v584 = vunpack.c.l.b16 %v494
    %v585 = vunpack.c.h.b16 %v494
    %v586 = vunpack.c.l.b16 %v495
    %v587 = vunpack.c.h.b16 %v495
    %v588 = vunpack.c.l.b16 %v496
    %v589 = vunpack.c.h.b16 %v496
    %v590 = vunpack.c.l.b16 %v497
    %v591 = vunpack.c.h.b16 %v497
    %v592 = vunpack.c.l.b16 %v498
    %v593 = vunpack.c.h.b16 %v498
    %v594 = vunpack.c.l.b16 %v499
    %v595 = vunpack.c.h.b16 %v499
    %v596 = vunpack.c.l.b16 %v500
    %v597 = vunpack.c.h.b16 %v500
    %v598 = vunpack.c.l.b16 %v501
    %v599 = vunpack.c.h.b16 %v501
    %v600 = vunpack.c.l.b16 %v502
    %v601 = vunpack.c.h.b16 %v502
    %v602 = vunpack.c.l.b16 %v503
    %v603 = vunpack.c.h.b16 %v503
    %v604 = vunpack.c.l.b16 %v504
    %v605 = vunpack.c.h.b16 %v504
    %v606 = vunpack.c.l.b16 %v505
    %v607 = vunpack.c.h.b16 %v505
    %v608 = vunpack.c.l.b16 %v506
    %v609 = vunpack.c.h.b16 %v506
    %v610 = vunpack.c.l.b16 %v507
    %v611 = vunpack.c.h.b16 %v507
    %v612 = vunpack.c.l.b16 %v508
    %v613 = vunpack.c.h.b16 %v508
    %v614 = vunpack.c.l.b16 %v509
    %v615 = vunpack.c.h.b16 %v509
    %v616 = vunpack.c.l.b16 %v510
    %v617 = vunpack.c.h.b16 %v510
    %v618 = vunpack.c.l.b16 %v511
    %v619 = vunpack.c.h.b16 %v511
    %v620 = vpack.c.b16 %v558, %v556
    %v621 = vpack.c.b16 %v559, %v557
    %v622 = vpack.c.b16 %v562, %v560
    %v623 = vpack.c.b16 %v563, %v561
    %v624 = vpack.c.b16 %v566, %v564
    %v625 = vpack.c.b16 %v567, %v565
    %v626 = vpack.c.b16 %v570, %v568
    %v627 = vpack.c.b16 %v571, %v569
    %v628 = vpack.c.b16 %v574, %v572
    %v629 = vpack.c.b16 %v575, %v573
    %v630 = vpack.c.b16 %v578, %v576
    %v631 = vpack.c.b16 %v579, %v577
    %v632 = vpack.c.b16 %v582, %v580
    %v633 = vpack.c.b16 %v583, %v581
    %v634 = vpack.c.b16 %v586, %v584
    %v635 = vpack.c.b16 %v587, %v585
    %v636 = vpack.c.b16 %v590, %v588
    %v637 = vpack.c.b16 %v591, %v589
    %v638 = vpack.c.b16 %v594, %v592
    %v639 = vpack.c.b16 %v595, %v593
    %v640 = vpack.c.b16 %v598, %v596
    %v641 = vpack.c.b16 %v599, %v597
    %v642 = vpack.c.b16 %v602, %v600
    %v643 = vpack.c.b16 %v603, %v601
    %v644 = vpack.c.b16 %v606, %v604
    %v645 = vpack.c.b16 %v607, %v605
    %v646 = vpack.c.b16 %v610, %v608
    %v647 = vpack.c.b16 %v611, %v609
    %v648 = vpack.c.b16 %v614, %v612
    %v649 = vpack.c.b16 %v615, %v613
    %v650 = vpack.c.b16 %v618, %v616
    %v651 = vpack.c.b16 %v619, %v617
    %684 = vmatprep.subr.bf16.mxu0 %v621
    %685 = vmatpush1.bf16.msra.mxu0 %v620
    %686 = vmatprep.subr.bf16.mxu0 %v623
    %687 = vmatpush1.bf16.msra.mxu0 %v622
    %688 = vmatprep.subr.bf16.mxu0 %v625
    %689 = vmatpush1.bf16.msra.mxu0 %v624
    %690 = vmatprep.subr.bf16.mxu0 %v627
    %691 = vmatpush1.bf16.msra.mxu0 %v626
    %692 = vmatprep.subr.bf16.mxu0 %v629
    %693 = vmatpush1.bf16.msra.mxu0 %v628
    %694 = vmatprep.subr.bf16.mxu0 %v631
    %695 = vmatpush1.bf16.msra.mxu0 %v630
    %696 = vmatprep.subr.bf16.mxu0 %v633
    %697 = vmatpush1.bf16.msra.mxu0 %v632
    %698 = vmatprep.subr.bf16.mxu0 %v635
    %699 = vmatpush1.bf16.msra.mxu0 %v634
    %700 = vmatprep.subr.bf16.mxu0 %v637
    %701 = vmatpush1.bf16.msra.mxu0 %v636
    %702 = vmatprep.subr.bf16.mxu0 %v639
    %703 = vmatpush1.bf16.msra.mxu0 %v638
    %704 = vmatprep.subr.bf16.mxu0 %v641
    %705 = vmatpush1.bf16.msra.mxu0 %v640
    %706 = vmatprep.subr.bf16.mxu0 %v643
    %707 = vmatpush1.bf16.msra.mxu0 %v642
    %708 = vmatprep.subr.bf16.mxu0 %v645
    %709 = vmatpush1.bf16.msra.mxu0 %v644
    %710 = vmatprep.subr.bf16.mxu0 %v647
    %711 = vmatpush1.bf16.msra.mxu0 %v646
    %712 = vmatprep.subr.bf16.mxu0 %v649
    %713 = vmatpush1.bf16.msra.mxu0 %v648
    %714 = vmatprep.subr.bf16.mxu0 %v651
    %715 = vmatpush1.bf16.msra.mxu0 %v650
    %716 = vmatprep.mubr.bf16.mxu0 %v232
    %717 = vmatmul.mubr.bf16.gmra.mrb[0].mxu0 %v231
    %v718 = vpop.f32.mrb[0].mxu0
    %v719 = vadd.f32 %v517, %v718
    %v720 = vpop.f32.mrb[0].mxu0
    %v721 = vadd.f32 %v521, %v720
    %v722 = vpop.f32.mrb[0].mxu0
    %v723 = vpop.f32.mrb[0].mxu0
    %724 = vdwg.mxu0
    %v725 = vmax.f32 %v719, 0.0
    %v726 = vmax.f32 %v721, 0.0
    %v727 = vld [vmem:[%s7] sm:$0x3]
    %v729 = vlaneseq
    %v730 = vshrl.u32 %v729, 7
    %v731 = vsub.s32 0, %v730
    %v732 = vrot.slane %v727, %v731
    %v733 = vlaneseq
    %v734 = vshrl.u32 %v733, 7
    %v735 = vsub.s32 1, %v734
    %v736 = vrot.slane %v727, %v735
    %v739 = vmul.f32 %v478, %v732
    %v740 = vmul.f32 %v479, %v736
    %v741 = vadd.f32 %v739, %v740
    %742 = vadd.xlane.f32.xlu0 %v741
    %v743 = vpop.xlane.xlu0 %742
    %v744 = vld [vmem:[%s7 + $0x2] sm:$0x3]
    %v746 = vlaneseq
    %v747 = vshrl.u32 %v746, 7
    %v748 = vsub.s32 0, %v747
    %v749 = vrot.slane %v744, %v748
    %v750 = vlaneseq
    %v751 = vshrl.u32 %v750, 7
    %v752 = vsub.s32 1, %v751
    %v753 = vrot.slane %v744, %v752
    %v756 = vmul.f32 %v725, %v749
    %v757 = vmul.f32 %v726, %v753
    %v758 = vadd.f32 %v756, %v757
    %759 = vadd.xlane.f32.xlu0 %v758
    %v760 = vpop.xlane.xlu0 %759
    %vm761 = vcmask 7168
    %v762 = vsel %vm761, %v743, %v760
    %v763 = vld [vmem:[%s8] sm:$0x1]
    %v765 = vlaneseq
    %v766 = vshrl.u32 %v765, 7
    %v767 = vsub.s32 0, %v766
    %v768 = vrot.slane %v763, %v767
    %v770 = vadd.f32 %v762, %v768
    %771 = vxpose.xlu0.b32.start [1/16] %v770, 128
    %772 = vxpose.xlu0.b32.cont [2/16] 0.0, 128
    %773 = vxpose.xlu0.b32.cont [3/16] 0.0, 128
    %774 = vxpose.xlu0.b32.cont [4/16] 0.0, 128
    %775 = vxpose.xlu0.b32.cont [5/16] 0.0, 128
    %776 = vxpose.xlu0.b32.cont [6/16] 0.0, 128
    %777 = vxpose.xlu0.b32.cont [7/16] 0.0, 128
    %778 = vxpose.xlu0.b32.cont [8/16] 0.0, 128
    %779 = vxpose.xlu0.b32.cont [9/16] 0.0, 128
    %780 = vxpose.xlu0.b32.cont [10/16] 0.0, 128
    %781 = vxpose.xlu0.b32.cont [11/16] 0.0, 128
    %782 = vxpose.xlu0.b32.cont [12/16] 0.0, 128
    %783 = vxpose.xlu0.b32.cont [13/16] 0.0, 128
    %784 = vxpose.xlu0.b32.cont [14/16] 0.0, 128
    %785 = vxpose.xlu0.b32.cont [15/16] 0.0, 128
    %786 = vxpose.xlu0.b32.end [16/16] 0.0, 128
    %v787 = vpop.trf.xlu0
    %v788 = vpop.trf.xlu0
    %v789 = vpop.trf.xlu0
    %v790 = vpop.trf.xlu0
    %v791 = vpop.trf.xlu0
    %v792 = vpop.trf.xlu0
    %v793 = vpop.trf.xlu0
    %v794 = vpop.trf.xlu0
    %v795 = vpop.trf.xlu0
    %v796 = vpop.trf.xlu0
    %v797 = vpop.trf.xlu0
    %v798 = vpop.trf.xlu0
    %v799 = vpop.trf.xlu0
    %v800 = vpop.trf.xlu0
    %v801 = vpop.trf.xlu0
    %v802 = vpop.trf.xlu0
    %vm803 = vcmask 58368
    %804 = vst.msk [vmem:[#allocation8] sm:$0x3] %vm803, %v787
    // Predicated region
    $region50: #{tpu_custom_call.1} parent=1 // pred_check
      _
    $region51: #{tpu_custom_call.1} parent=1 // pred_check_branch
      %806 = sbr.rel (0) target = $region53
    $region52: #{tpu_custom_call.1} parent=1 // pred_region
      %s808 = ssub.s32 32, 32
      %809 = vsyncadd [#allocation4], %s808
      %s811 = sshll.u32 [#allocation8], 4
      %s812 = int_to_ptr.vmem [resolvable:$true] %s811
      %814 = dma.vmem_to_hbm [thread:$0]  %s812, 32, %s9, [#allocation4]
    $region53: #{tpu_custom_call.1} parent=1 // pred_fallthru
      _
    // Predicated region
    $region54: #{tpu_custom_call.1} parent=1 // pred_check
      _
    $region55: #{tpu_custom_call.1} parent=1 // pred_check_branch
      %816 = sbr.rel (0) target = $region57
    $region56: #{tpu_custom_call.1} parent=1 // pred_region
      %817 = dma.done [#allocation4], 32
    $region57: #{tpu_custom_call.1} parent=1 // pred_fallthru
      _
    %818 = vsyncpa [#allocation3], 1
    %819 = vsyncpa [#allocation6], 1
    %820 = vsyncpa [#allocation4], 1

</llo_original>
